<compile_context>
chip_gen: v5e
topology: v5e:2x2
jax: 0.10.0
libtpu: 0.0.40
codegen_flags: <defaults>
</compile_context>

<pallas_src>
import math

import jax
import jax.numpy as jnp
from jax.experimental import pallas as pl
from jax.experimental.pallas import tpu as pltpu

_LANE = 128
_SUBLANE = 8


def _default_block_bytes() -> int:
    """2 MiB everywhere; 4 MiB on v7-class chips (faster HBM, 32 MiB scoped VMEM)."""
    try:
        kind = jax.devices()[0].device_kind.lower()
    except Exception:  # pragma: no cover - be robust on exotic backends
        return 2 * 1024 * 1024
    if "v7" in kind:
        return 4 * 1024 * 1024
    return 2 * 1024 * 1024


def _drop_path_kernel(scale_ref, x_ref, o_ref):
    # scale_ref: VMEM (TB, 1) float32, values in {0, 1/keep_prob}
    # x_ref/o_ref: VMEM (TB, TN) tiles of the flattened (B, N) tensor
    o_ref[...] = (x_ref[...].astype(jnp.float32) * scale_ref[...]).astype(o_ref.dtype)


def drop_path(x, drop_prob: float = 0.0, training: bool = False, *, key=None,
              target_block_bytes: int | None = None):
    """Pallas TPU implementation of timm-style stochastic depth (per-sample)."""
    if drop_prob == 0.0 or not training:
        return x
    if key is None:
        raise ValueError("drop_path needs a PRNG key when training with drop_prob > 0")

    keep_prob = 1.0 - drop_prob
    if keep_prob <= 0.0:
        # Every path dropped. Avoid the 0 * (1/0) = NaN the naive formula gives.
        return jnp.zeros_like(x)

    if target_block_bytes is None:
        target_block_bytes = _default_block_bytes()

    B = x.shape[0]
    N = math.prod(x.shape[1:]) if x.ndim > 1 else 1

    # Per-sample scale in float32 (same recipe as PyTorch, kept in f32 so bf16
    # inputs don't bias the keep probability):
    #   floor(keep_prob + U[0,1)) / keep_prob  ->  {0, 1/keep_prob}
    u = jax.random.uniform(key, (B, 1), dtype=jnp.float32)
    scale = jnp.floor(keep_prob + u) * jnp.float32(1.0 / keep_prob)

    # Flat (B, N) view; free for contiguous row-major inputs, streamed once.
    x_flat = x.reshape(B, N)

    itemsize = jnp.dtype(x.dtype).itemsize
    # Packed-sublane granule: 8 rows for 4-byte, 16 for 2-byte, 32 for 1-byte.
    granule = max(_SUBLANE, 32 // itemsize)
    row_bytes = max(N * itemsize, 1)

    if row_bytes * granule <= target_block_bytes:
        # Small per-sample features (common case): keep the whole feature dim
        # per block (block extent == array extent, so ragged N needs no padding
        # or masking) and batch samples per block to reach ~target bytes.
        tn = N
        tb_fit = max(1, target_block_bytes // row_bytes)
        if B <= tb_fit:
            tb = B
        else:
            tb = max(granule, (tb_fit // granule) * granule)
    else:
        # Large per-sample features: a few samples per block, tile the feature
        # dim in lane-dense multiples of 128; ragged last block is masked.
        tb = B if B < granule else granule
        tn = max(_LANE, (target_block_bytes // (tb * itemsize)) // _LANE * _LANE)
        tn = min(tn, pl.cdiv(N, _LANE) * _LANE)

    grid = (pl.cdiv(B, tb), pl.cdiv(N, tn))

    cost = pl.CostEstimate(
        flops=B * N,
        transcendentals=0,
        bytes_accessed=2 * B * N * itemsize + B * 4,
    )

    out_flat = pl.pallas_call(
        _drop_path_kernel,
        out_shape=jax.ShapeDtypeStruct((B, N), x.dtype),
        grid_spec=pltpu.PrefetchScalarGridSpec(
            num_scalar_prefetch=0,
            grid=grid,
            in_specs=[
                pl.BlockSpec((tb, 1), lambda i, j: (i, 0)),    # per-sample scale
                pl.BlockSpec((tb, tn), lambda i, j: (i, j)),   # data tile
            ],
            out_specs=pl.BlockSpec((tb, tn), lambda i, j: (i, j)),
        ),
        compiler_params=pltpu.CompilerParams(
            dimension_semantics=("parallel", "parallel"),
        ),
        cost_estimate=cost,
    )(scale, x_flat)

    return out_flat.reshape(x.shape)


class DropPath:
    """Mirror of the PyTorch nn.Module (no learnable parameters)."""

    def __init__(self, drop_prob=None):
        self.drop_prob = drop_prob if drop_prob is not None else 0.0
        self.training = True

    def __call__(self, x, *, key):
        return drop_path(x, self.drop_prob, self.training, key=key)


def _reference_drop_path(x, drop_prob, key):
    """Pure-JAX reference using the identical mask recipe (f32 mask)."""
    keep_prob = 1.0 - drop_prob
    if keep_prob <= 0.0:
        return jnp.zeros_like(x)
    u = jax.random.uniform(key, (x.shape[0], 1), dtype=jnp.float32)
    scale = jnp.floor(keep_prob + u) * jnp.float32(1.0 / keep_prob)
    scale = scale.reshape((x.shape[0],) + (1,) * (x.ndim - 1))
    return (x.astype(jnp.float32) * scale).astype(x.dtype)


if __name__ == "__main__":
    key = jax.random.PRNGKey(0)
    k_x, k_mask, k_x2, k_x3 = jax.random.split(key, 4)

    drop_prob = 0.5
    module = DropPath(drop_prob)
    module.training = True

    # Case 1: NCHW, feature size a multiple of 128 (single full-feature block).
    B, C, H, W = 2, 4, 16, 16
    x = jax.random.normal(k_x, (B, C, H, W), dtype=jnp.float32)
    out = jax.block_until_ready(module(x, key=k_mask))
    ref = _reference_drop_path(x, drop_prob, k_mask)
    assert out.shape == x.shape and out.dtype == x.dtype
    assert jnp.allclose(out, ref, atol=1e-6, rtol=1e-6)

    # Case 2: ragged feature size (block extent == array extent, no padding).
    x2 = jax.random.normal(k_x2, (2, 3, 7, 10), dtype=jnp.float32)
    out2 = jax.block_until_ready(module(x2, key=k_mask))
    ref2 = _reference_drop_path(x2, drop_prob, k_mask)
    assert out2.shape == x2.shape and out2.dtype == x2.dtype
    assert jnp.allclose(out2, ref2, atol=1e-6, rtol=1e-6)

    # Case 3: force the tiled-feature path with ragged batch AND feature blocks
    # (B=10 -> blocks of 8 samples, last block ragged; last feature block ragged).
    x3 = jax.random.normal(k_x3, (10, 4, 40, 41), dtype=jnp.float32)
    out3 = jax.block_until_ready(
        drop_path(x3, drop_prob, True, key=k_mask, target_block_bytes=64 * 1024))
    ref3 = _reference_drop_path(x3, drop_prob, k_mask)
    assert out3.shape == x3.shape and out3.dtype == x3.dtype
    assert jnp.allclose(out3, ref3, atol=1e-6, rtol=1e-6)

    # drop_prob == 1.0: all paths dropped -> zeros (guarded, no NaN).
    out_all = jax.block_until_ready(drop_path(x, 1.0, True, key=k_mask))
    assert jnp.array_equal(out_all, jnp.zeros_like(x))

    # Eval / drop_prob=0 path: identity.
    module.training = False
    out_eval = jax.block_until_ready(module(x, key=k_mask))
    assert jnp.array_equal(out_eval, x)

    print("KERNEL_OK")
</pallas_src>

<mosaic_0001>
module attributes {stable_mosaic.version = 11 : i64} {
  func.func @_drop_path_kernel(%arg0: i32, %arg1: i32, %arg2: memref<2x1xf32, #tpu.memory_space<vmem>>, %arg3: memref<2x1024xf32, #tpu.memory_space<vmem>>, %arg4: memref<2x1024xf32, #tpu.memory_space<vmem>>) attributes {dimension_semantics = [#tpu.dimension_semantics<parallel>, #tpu.dimension_semantics<parallel>], iteration_bounds = array<i64: 1, 1>, scalar_prefetch = 0 : i64, scratch_operands = 0 : i64, tpu.core_type = #tpu.core_type<tc>, window_params = [{transform_indices = @transform_0, window_bounds = array<i64: 2, 1>}, {transform_indices = @transform_1, window_bounds = array<i64: 2, 1024>}, {transform_indices = @transform_2, window_bounds = array<i64: 2, 1024>}]} {
    %c0 = arith.constant 0 : index
    %c0_0 = arith.constant 0 : index
    %0 = vector.load %arg3[%c0, %c0_0] : memref<2x1024xf32, #tpu.memory_space<vmem>>, vector<2x1024xf32>
    %c0_1 = arith.constant 0 : index
    %c0_2 = arith.constant 0 : index
    %1 = vector.load %arg2[%c0_1, %c0_2] : memref<2x1xf32, #tpu.memory_space<vmem>>, vector<2x1xf32>
    %2 = vector.broadcast %1 : vector<2x1xf32> to vector<2x1024xf32>
    %3 = arith.mulf %0, %2 : vector<2x1024xf32>
    %c0_3 = arith.constant 0 : index
    %c0_4 = arith.constant 0 : index
    %4 = vector.load %arg4[%c0_3, %c0_4] : memref<2x1024xf32, #tpu.memory_space<vmem>>, vector<2x1024xf32>
    tpu.vector_store %arg4[%c0_3, %c0_4], %3 {strides = array<i32>} : memref<2x1024xf32, #tpu.memory_space<vmem>>, vector<2x1024xf32>,
    return
  }
  func.func @transform_0(%arg0: i32, %arg1: i32) -> (i32, i32) {
    %c0_i32 = arith.constant 0 : i32
    %c0_i32_0 = arith.constant 0 : i32
    return %arg0, %c0_i32 : i32, i32
  }
  func.func @transform_1(%arg0: i32, %arg1: i32) -> (i32, i32) {
    %c0_i32 = arith.constant 0 : i32
    return %arg0, %arg1 : i32, i32
  }
  func.func @transform_2(%arg0: i32, %arg1: i32) -> (i32, i32) {
    %c0_i32 = arith.constant 0 : i32
    return %arg0, %arg1 : i32, i32
  }
}

</mosaic_0001>

<llo_original>
// kernel: tpu_custom_call.1
$region0: #{tpu_custom_call.1}
  #allocation0 [shape = 'u32[]', space=smem, size = 0x4, offset = 0x4, fixed_abs, tag = 'smem constant byte address 0x4 - core index']
  #allocation1 [shape = 'u32[72,128]{1,0:T(1,128)}', space=vmem, size = 0x9000, scoped, tag = 'internal scratch']
  %s0 = inlined_call_operand.vmem [shape: f32[2,1], index: 0, kind: input, shape index: {}]
  %s1 = inlined_call_operand.hbm [shape: f32[2,1024], index: 1, kind: input, shape index: {}]
  %s2 = inlined_call_operand.hbm [shape: f32[2,1024], index: 2, kind: output, shape index: {}]
  %s3 = sld [smem:[#allocation0]]
  $region22: #{tpu_custom_call.1} parent=0
    _
  %s5 = ssub.s32 1, %s3
  %s6 = scalar_select 0, %s5, %s3
  $region1: #{tpu_custom_call.1} parent=0
    #allocation2 [shape = 'u8[8192]{0}', space=vmem, size = 0x2000, scoped, tag = 'input window, operand 1, single buffered']
    #allocation3 [shape = 's32[1]{0}', space=sflag, size = 0x4, scoped, tag = 'scoped memory for tpu_custom_call.1']
    #allocation4 [shape = 's32[1]{0}', space=sflag, size = 0x4, scoped, tag = 'scoped memory for tpu_custom_call.1']
    #allocation5 [shape = 'u8[8192]{0}', space=vmem, size = 0x2000, scoped, tag = 'output window, operand 0, single buffered']
    %7 = vsyncpa [#allocation3], 0
    %8 = vsyncpa [#allocation4], 0
    // Predicated region
    $region2: #{tpu_custom_call.1} parent=1 // pred_check
      _
    $region3: #{tpu_custom_call.1} parent=1 // pred_check_branch
      %10 = sbr.rel (0) target = $region5
    $region4: #{tpu_custom_call.1} parent=1 // pred_region
      _
    $region5: #{tpu_custom_call.1} parent=1 // pred_fallthru
      _
    // Predicated region
    $region6: #{tpu_custom_call.1} parent=1 // pred_check
      _
    $region7: #{tpu_custom_call.1} parent=1 // pred_check_branch
      %12 = sbr.rel (0) target = $region9
    $region8: #{tpu_custom_call.1} parent=1 // pred_region
      %14 = vsyncadd [#allocation3], 0
      %s16 = sshll.u32 %s1, 4
      %s17 = int_to_ptr.hbm [resolvable:$true] %s16
      %s18 = sshll.u32 [#allocation2], 4
      %s19 = int_to_ptr.vmem [resolvable:$true] %s18
      %21 = dma.hbm_to_vmem [thread:$0]  %s17, 256, %s19, [#allocation3]
    $region9: #{tpu_custom_call.1} parent=1 // pred_fallthru
      _
    // Predicated region
    $region10: #{tpu_custom_call.1} parent=1 // pred_check
      _
    $region11: #{tpu_custom_call.1} parent=1 // pred_check_branch
      %23 = sbr.rel (0) target = $region13
    $region12: #{tpu_custom_call.1} parent=1 // pred_region
      %25 = dma.done [#allocation3], 256
    $region13: #{tpu_custom_call.1} parent=1 // pred_fallthru
      _
    %v26 = vld [vmem:[#allocation2] sm:$0xff]
    %v27 = vld [vmem:[#allocation2 + $0x8] sm:$0xff]
    %v28 = vld [vmem:[%s0] sm:$0x3]
    %30 = vset.pattern.permute.xlu0 0
    %31 = vperm.xlu0 %30, %v28
    %v32 = vpop.permute.xlu0 %31
    %v34 = vunpack.c.l.s4 269488144
    %v35 = vunpack.c.0.s8 %v34
    %v36 = vperm.slane %v32, %v35
    %v38 = vmul.f32 %v26, %v36
    %v39 = vmul.f32 %v27, %v36
    %40 = vst [vmem:[#allocation5] sm:$0xff] %v38
    %41 = vst [vmem:[#allocation5 + $0x8] sm:$0xff] %v39
    // Predicated region
    $region14: #{tpu_custom_call.1} parent=1 // pred_check
      _
    $region15: #{tpu_custom_call.1} parent=1 // pred_check_branch
      %43 = sbr.rel (0) target = $region17
    $region16: #{tpu_custom_call.1} parent=1 // pred_region
      %45 = vsyncadd [#allocation4], 0
      %s47 = sshll.u32 [#allocation5], 4
      %s48 = int_to_ptr.vmem [resolvable:$true] %s47
      %s49 = sshll.u32 %s2, 4
      %s50 = int_to_ptr.hbm [resolvable:$true] %s49
      %52 = dma.vmem_to_hbm [thread:$0]  %s48, 256, %s50, [#allocation4]
    $region17: #{tpu_custom_call.1} parent=1 // pred_fallthru
      _
    // Predicated region
    $region18: #{tpu_custom_call.1} parent=1 // pred_check
      _
    $region19: #{tpu_custom_call.1} parent=1 // pred_check_branch
      %54 = sbr.rel (0) target = $region21
    $region20: #{tpu_custom_call.1} parent=1 // pred_region
      %56 = dma.done [#allocation4], 256
    $region21: #{tpu_custom_call.1} parent=1 // pred_fallthru
      _
    %57 = vsyncpa [#allocation3], 1
    %58 = vsyncpa [#allocation4], 1

</llo_original>
